<compile_context>
chip_gen: v7x
topology: tpu7x:2x2x1
jax: 0.10.0
libtpu: 0.0.40
codegen_flags: <defaults>
</compile_context>

<pallas_src>
import jax
import jax.numpy as jnp
from jax.experimental import pallas as pl
from jax.experimental.pallas import tpu as pltpu


def _topo_grad_kernel(g_ref, mask_ref, grad_ref):
    # TODO(synk): gudhi.CubicalComplex persistent homology / betti_numbers has
    # no Pallas equivalent; under the module's `gudhi is None` fallback every
    # (perturbed) signature is zeros(2), so the softmax/argmax token stream is
    # dead work (omitted) and the finite difference collapses to the per-batch
    # SMEM scalar g[b] = (mse(zeros, target[b]) - loss) / eps.
    b = pl.program_id(0)
    grad_ref[...] = mask_ref[...] * g_ref[b]


def _pick_l_tile(L_pad, B):
    """Lane-dense L tile (multiple of 128).

    The only streamed data is the f32 mask row plus the f32 grad row, so the
    VMEM budget is generous: cap each buffer at ~2 MiB (double-buffered mask +
    grad stays ~8 MiB, well under the 32 MiB limit on v5e/v6e/v7x).  Keep at
    least two total grid blocks when L allows it so v7x's second TensorCore
    isn't idle.
    """
    assert L_pad % 128 == 0
    tl = min(L_pad, (2 * 1024 * 1024) // 4)          # <= 512K lanes per buffer
    if B * (L_pad // tl) < 2 and L_pad >= 256:
        tl = L_pad // 2
    return max(128, (tl // 128) * 128)


def topological_loss(logits, mask, target_signature=None,
                     *, lambda_topo=1.0, eps=1e-3):
    """JAX/Pallas port of TopologicalLoss.forward -> (loss, grad).

    lambda_topo is stored by the torch module but never used in forward().
    """
    B, L, C = logits.shape
    mask_f = mask.astype(jnp.float32)
    if target_signature is None:
        target = jnp.zeros((B, 2), jnp.float32)
    else:
        target = target_signature.astype(jnp.float32)

    # Signature fallback (gudhi is None): all Betti signatures are zeros(2).
    sq = target ** 2                           # (zeros - target)^2
    loss = jnp.mean(sq)                        # F.mse_loss(signatures, target)
    per_b = jnp.mean(sq, axis=-1)              # loss_p[b] = mse(zeros, target[b])
    g = ((per_b - loss) / jnp.float32(eps)).astype(jnp.float32)   # (B,)

    # Pad L to a lane-dense multiple of 128 (zero mask pad -> zero grad pad);
    # avoids a full-extent fallback block that could exceed v7x's 64 MiB VMEM
    # for large unaligned L, and keeps every DMA / store unmasked.
    L_pad = ((L + 127) // 128) * 128
    mask3 = jnp.pad(mask_f.reshape(B, 1, L), ((0, 0), (0, 0), (0, L_pad - L)))

    tl = _pick_l_tile(L_pad, B)
    n_lt = pl.cdiv(L_pad, tl)

    grad_bl = pl.pallas_call(
        _topo_grad_kernel,
        out_shape=jax.ShapeDtypeStruct((B, 1, L_pad), jnp.float32),
        grid_spec=pltpu.PrefetchScalarGridSpec(
            num_scalar_prefetch=1,                          # g -> SMEM
            grid=(B, n_lt),
            in_specs=[
                pl.BlockSpec((1, 1, tl), lambda b, lt, g_sm: (b, 0, lt)),
            ],
            out_specs=pl.BlockSpec((1, 1, tl), lambda b, lt, g_sm: (b, 0, lt)),
        ),
        compiler_params=pltpu.CompilerParams(
            dimension_semantics=("parallel", "parallel"),
            vmem_limit_bytes=32 * 1024 * 1024),
    )(g, mask3)

    # grad is constant along the class axis; broadcast outside the kernel so
    # the kernel writeback stays C x smaller and lane-dense.  (If the caller
    # can consume a compact (B, L) grad, this broadcast fuses / can be elided.)
    grad = jnp.broadcast_to(grad_bl[:, 0, :L][..., None],
                            (B, L, C)).astype(logits.dtype)
    return loss, grad


if __name__ == "__main__":
    # Small shapes consistent with forward(): L must be a perfect square.
    B, L, C = 2, 1024, 8          # size = sqrt(L) = 32
    key = jax.random.PRNGKey(0)
    k1, k2, k3 = jax.random.split(key, 3)
    logits = jax.random.normal(k1, (B, L, C), dtype=jnp.float32)
    mask = jax.random.bernoulli(k2, 0.3, (B, L))              # BoolTensor analogue
    target_signature = jax.random.normal(k3, (B, 2), dtype=jnp.float32)

    loss, grad = topological_loss(logits, mask, target_signature,
                                  lambda_topo=1.0, eps=1e-3)
    jax.block_until_ready((loss, grad))
    assert loss.shape == () and grad.shape == (B, L, C)

    # Pure-JAX reference of the gudhi-None fallback semantics.
    tgt = target_signature.astype(jnp.float32)
    ref_loss = jnp.mean(tgt ** 2)
    ref_g = (jnp.mean(tgt ** 2, axis=-1) - ref_loss) / jnp.float32(1e-3)
    ref_grad = jnp.broadcast_to(
        (mask.astype(jnp.float32) * ref_g[:, None])[:, :, None], (B, L, C))
    assert bool(jnp.allclose(loss, ref_loss, rtol=1e-6, atol=1e-6))
    assert bool(jnp.allclose(grad, ref_grad, rtol=1e-5, atol=1e-5))

    # Unaligned-L path (exercises the wrapper's zero-padding + slice-back).
    B2, L2, C2 = 3, 49, 5         # size = sqrt(49) = 7
    l2 = jax.random.normal(k1, (B2, L2, C2), dtype=jnp.float32)
    m2 = jax.random.bernoulli(k3, 0.5, (B2, L2))
    t2 = jax.random.normal(k2, (B2, 2), dtype=jnp.float32)
    loss2, grad2 = topological_loss(l2, m2, t2)
    jax.block_until_ready((loss2, grad2))
    assert loss2.shape == () and grad2.shape == (B2, L2, C2)
    ref_loss2 = jnp.mean(t2 ** 2)
    ref_g2 = (jnp.mean(t2 ** 2, axis=-1) - ref_loss2) / jnp.float32(1e-3)
    ref_grad2 = jnp.broadcast_to(
        (m2.astype(jnp.float32) * ref_g2[:, None])[:, :, None], (B2, L2, C2))
    assert bool(jnp.allclose(loss2, ref_loss2, rtol=1e-6, atol=1e-6))
    assert bool(jnp.allclose(grad2, ref_grad2, rtol=1e-5, atol=1e-5))

    print("KERNEL_OK")
</pallas_src>

<mosaic_0001>
module attributes {stable_mosaic.version = 11 : i64} {
  func.func @_topo_grad_kernel(%arg0: i32, %arg1: i32, %arg2: memref<2xf32, #tpu.memory_space<smem>>, %arg3: memref<1x1x1024xf32, #tpu.memory_space<vmem>>, %arg4: memref<1x1x1024xf32, #tpu.memory_space<vmem>>) attributes {dimension_semantics = [#tpu.dimension_semantics<parallel>, #tpu.dimension_semantics<parallel>], iteration_bounds = array<i64: 2, 1>, scalar_prefetch = 1 : i64, scratch_operands = 0 : i64, tpu.core_type = #tpu.core_type<tc>, window_params = [{transform_indices = @transform_0, window_bounds = array<i64: 1, 1, 1024>}, {transform_indices = @transform_1, window_bounds = array<i64: 1, 1, 1024>}]} {
    %c0 = arith.constant 0 : index
    %c0_0 = arith.constant 0 : index
    %c0_1 = arith.constant 0 : index
    %0 = vector.load %arg3[%c0, %c0_0, %c0_1] : memref<1x1x1024xf32, #tpu.memory_space<vmem>>, vector<1x1x1024xf32>
    %1 = arith.index_cast %arg0 : i32 to index
    %2 = memref.load %arg2[%1] : memref<2xf32, #tpu.memory_space<smem>>
    %3 = vector.broadcast %2 : f32 to vector<1x1x1024xf32>
    %4 = arith.mulf %0, %3 : vector<1x1x1024xf32>
    %c0_2 = arith.constant 0 : index
    %c0_3 = arith.constant 0 : index
    %c0_4 = arith.constant 0 : index
    %5 = vector.load %arg4[%c0_2, %c0_3, %c0_4] : memref<1x1x1024xf32, #tpu.memory_space<vmem>>, vector<1x1x1024xf32>
    tpu.vector_store %arg4[%c0_2, %c0_3, %c0_4], %4 {strides = array<i32>} : memref<1x1x1024xf32, #tpu.memory_space<vmem>>, vector<1x1x1024xf32>,
    return
  }
  func.func @transform_0(%arg0: i32, %arg1: i32, %arg2: memref<2xf32, #tpu.memory_space<smem>>) -> (i32, i32, i32) {
    %c0_i32 = arith.constant 0 : i32
    %c0_i32_0 = arith.constant 0 : i32
    return %arg0, %c0_i32, %arg1 : i32, i32, i32
  }
  func.func @transform_1(%arg0: i32, %arg1: i32, %arg2: memref<2xf32, #tpu.memory_space<smem>>) -> (i32, i32, i32) {
    %c0_i32 = arith.constant 0 : i32
    %c0_i32_0 = arith.constant 0 : i32
    return %arg0, %c0_i32, %arg1 : i32, i32, i32
  }
}

</mosaic_0001>

<llo_original>
// kernel: tpu_custom_call.1
$region0: #{tpu_custom_call.1}
  #allocation0 [shape = 'u32[]', space=smem, size = 0x4, offset = 0x4, fixed_abs, tag = 'smem constant byte address 0x4 - core index']
  #allocation1 [shape = 'u32[144,128]{1,0:T(1,128)}', space=vmem, size = 0x12000, scoped, tag = 'internal scratch']
  #allocation2 [shape = 's32[1]{0}', space=sflag, size = 0x4, scoped, tag = 'scoped memory for tpu_custom_call.1']
  #allocation3 [shape = 'u8[512]{0}', space=smem, size = 0x200, scoped, tag = 'prefetched SMEM operand 0']
  %s0 = inlined_call_operand.hbm [shape: f32[2], index: 0, kind: input, shape index: {}]
  %s1 = inlined_call_operand.hbm [shape: f32[2,1,1024], index: 1, kind: input, shape index: {}]
  %s2 = inlined_call_operand.hbm [shape: f32[2,1,1024], index: 2, kind: output, shape index: {}]
  %s3 = sld [smem:[#allocation0]]
  $region41: #{tpu_custom_call.1} parent=0
    _
  %s5 = ssub.s32 1, %s3
  %s6 = scalar_select 0, %s5, %s3
  %8 = dma.hbm_to_smem %s0, 16, [#allocation3], [#allocation2]
  %9 = dma.done [#allocation2], 16
  %10 = sfence
  $region1: #{tpu_custom_call.1} parent=0
    #allocation4 [shape = 'u8[8192]{0}', space=vmem, size = 0x2000, scoped, tag = 'input window, operand 1']
    #allocation5 [shape = 's32[2]{0}', space=sflag, size = 0x8, scoped, tag = 'scoped memory for tpu_custom_call.1']
    #allocation6 [shape = 's32[2]{0}', space=sflag, size = 0x8, scoped, tag = 'scoped memory for tpu_custom_call.1']
    #allocation7 [shape = 'u8[8192]{0}', space=vmem, size = 0x2000, scoped, tag = 'output window, operand 0']
    %11 = vsyncpa [#allocation5], 0
    %s12 = scalar_lea.sflag [#allocation5], 1
    %13 = vsyncpa %s12, 0
    %14 = vsyncpa [#allocation6], 0
    %s15 = scalar_lea.sflag [#allocation6], 1
    %16 = vsyncpa %s15, 0
    loop: start=0, step=1, limit=4
    $region2: #{tpu_custom_call.1} parent=1 // loop_pre_header
      _
    $region3: #{tpu_custom_call.1} parent=1 // loop_header
      %s18 = sphi 0, %s22
      %p19 = scmp.ge.s32.totalorder %s18, 4
      %s25 = sphi 0, %s37
      %s26 = sphi 0, %s33
      %s27 = sphi 0, %s25
      %s28 = sphi 0, %s26
      %s29 = sphi 0, %s27
      %s30 = sphi 0, %s28
      %s42 = sphi 0, %s44
      %s45 = sphi 0, %s42
      %s46 = sphi 0, %s45
      %s62 = sphi 0, %s46
      %s70 = sphi 0, %s72
      %s73 = sphi 0, %s70
      %s74 = sphi 0, %s73
      %s90 = sphi 0, %s74
    $region4: #{tpu_custom_call.1} parent=1 // loop_header_branch
      %21 = sbr.rel (%p19) target = $region8
    $region5: #{tpu_custom_call.1} parent=1 // loop_body
      %s23 = ssub.s32 %s18, 1
      %s24 = ssub.s32 %s18, 2
      %s31 = sadd.s32 1, %s26
      %p32 = scmp.ge.s32.totalorder %s31, 1
      %s33 = scalar_select %p32, 0, %s31
      %s34 = sadd.s32 1, %s25
      %s35 = scalar_select %p32, %s34, %s25
      %p36 = scmp.ge.s32.totalorder %s35, 2
      %s37 = scalar_select %p36, 0, %s35
      %s38 = ssub.s32 %s25, %s37
      %s39 = ssub.s32 %s26, %s33
      %s40 = sor.u32 %s38, %s39
      %p41 = scmp.eq.s32.totalorder %s40, 0
      %s43 = sadd.s32 %s42, 1
      %s44 = scalar_select %p41, %s42, %s43
      %p47 = pneg %p41
      %p48 = scmp.eq.s32.totalorder %s18, 1
      %p49 = por %p47, %p48
      %p50 = scmp.ne.s32.totalorder %s42, %s45
      %p51 = scmp.eq.s32.totalorder %s18, 0
      %p52 = por %p50, %p51
      %p53 = scmp.ne.s32.totalorder %s42, %s45
      %p54 = scmp.eq.s32.totalorder %s23, 1
      %p55 = por %p53, %p54
      %p56 = scmp.ne.s32.totalorder %s45, %s46
      %p57 = scmp.eq.s32.totalorder %s23, 0
      %p58 = por %p56, %p57
      %p59 = scmp.ne.s32.totalorder %s45, %s46
      %p60 = scmp.eq.s32.totalorder %s24, 1
      %p61 = por %p59, %p60
      %p63 = scmp.ne.s32.totalorder %s46, %s62
      %p64 = scmp.eq.s32.totalorder %s24, 0
      %p65 = por %p63, %p64
      %s66 = ssub.s32 %s25, %s37
      %s67 = ssub.s32 %s26, %s33
      %s68 = sor.u32 %s66, %s67
      %p69 = scmp.eq.s32.totalorder %s68, 0
      %s71 = sadd.s32 %s70, 1
      %s72 = scalar_select %p69, %s70, %s71
      %p75 = pneg %p69
      %p76 = scmp.eq.s32.totalorder %s18, 1
      %p77 = por %p75, %p76
      %p78 = scmp.ne.s32.totalorder %s70, %s73
      %p79 = scmp.eq.s32.totalorder %s18, 0
      %p80 = por %p78, %p79
      %p81 = scmp.ne.s32.totalorder %s70, %s73
      %p82 = scmp.eq.s32.totalorder %s23, 1
      %p83 = por %p81, %p82
      %p84 = scmp.ne.s32.totalorder %s73, %s74
      %p85 = scmp.eq.s32.totalorder %s23, 0
      %p86 = por %p84, %p85
      %p87 = scmp.ne.s32.totalorder %s73, %s74
      %p88 = scmp.eq.s32.totalorder %s24, 1
      %p89 = por %p87, %p88
      %p91 = scmp.ne.s32.totalorder %s74, %s90
      %p92 = scmp.eq.s32.totalorder %s24, 0
      %p93 = por %p91, %p92
      %p94 = scmp.le.s32.totalorder 1, %s18
      %p95 = scmp.lt.s32.totalorder %s18, 3
      %p96 = pnand %p94, %p95
      %p97 = pneg %p96
      // Predicated region
      $region9: #{tpu_custom_call.1} parent=5 // pred_check
        _
      $region10: #{tpu_custom_call.1} parent=5 // pred_check_branch
        %99 = sbr.rel (%p96) target = $region12
      $region11: #{tpu_custom_call.1} parent=5 // pred_region
        %s100 = ssub.s32 %s18, 1
      $region12: #{tpu_custom_call.1} parent=5 // pred_fallthru
        _
      %p101 = scmp.lt.s32.totalorder %s18, 2
      // Predicated region
      $region13: #{tpu_custom_call.1} parent=5 // pred_check
        %p102 = pneg %p101
      $region14: #{tpu_custom_call.1} parent=5 // pred_check_branch
        %104 = sbr.rel (%p102) target = $region16
      $region15: #{tpu_custom_call.1} parent=5 // pred_region
        // Predicated region
        $region17: #{tpu_custom_call.1} parent=15 // pred_check
          %p105 = pneg %p52
        $region18: #{tpu_custom_call.1} parent=15 // pred_check_branch
          %107 = sbr.rel (%p105) target = $region20
        $region19: #{tpu_custom_call.1} parent=15 // pred_region
          %s108 = sand.u32 %s42, 1
          %s109 = scalar_lea.sflag [#allocation5], %s108
          %s110 = sand.u32 %s42, 1
          %s111 = smul.addr %s110, 8
          %s112 = scalar_lea.vmem [#allocation4], %s111
          %s113 = smul.u32 8, %s26
          %s115 = ssub.s32 128, 128
          %116 = vsyncadd %s109, %s115
          %s117 = smul.addr %s25, 8
          %s118 = sadd.s32 %s113, %s117
          %s119 = smul.addr %s118, 16
          %s120 = scalar_lea.hbm %s1, %s119
          %s122 = sshll.u32 %s112, 4
          %s123 = int_to_ptr.vmem [resolvable:$true] %s122
          %125 = dma.hbm_to_vmem [thread:$0]  %s120, 128, %s123, %s109
        $region20: #{tpu_custom_call.1} parent=15 // pred_fallthru
          _
      $region16: #{tpu_custom_call.1} parent=5 // pred_fallthru
        _
      %p126 = scmp.le.s32.totalorder 1, %s18
      %p127 = scmp.lt.s32.totalorder %s18, 3
      %p128 = pnand %p126, %p127
      %p129 = pneg %p128
      // Predicated region
      $region21: #{tpu_custom_call.1} parent=5 // pred_check
        _
      $region22: #{tpu_custom_call.1} parent=5 // pred_check_branch
        %131 = sbr.rel (%p128) target = $region24
      $region23: #{tpu_custom_call.1} parent=5 // pred_region
        %s132 = ssub.s32 %s18, 1
        %s133 = sand.u32 %s45, 1
        %s134 = scalar_lea.sflag [#allocation5], %s133
        %s135 = sand.u32 %s45, 1
        %s136 = smul.addr %s135, 8
        %s137 = scalar_lea.vmem [#allocation4], %s136
        // Predicated region
        $region25: #{tpu_custom_call.1} parent=23 // pred_check
          %p138 = pneg %p58
        $region26: #{tpu_custom_call.1} parent=23 // pred_check_branch
          %140 = sbr.rel (%p138) target = $region28
        $region27: #{tpu_custom_call.1} parent=23 // pred_region
          %141 = dma.done %s134, 128
        $region28: #{tpu_custom_call.1} parent=23 // pred_fallthru
          _
        %s142 = sand.u32 %s45, 1
        %s143 = scalar_lea.sflag [#allocation5], %s142
        %s144 = sand.u32 %s45, 1
        %s145 = smul.addr %s144, 8
        %s146 = scalar_lea.vmem [#allocation4], %s145
        %p147 = pneg %p58
        %p148 = pneg %p55
        %p149 = pneg %p86
        %p150 = pneg %p83
        %s151 = sand.u32 %s73, 1
        %s152 = scalar_lea.sflag [#allocation6], %s151
        %s153 = sand.u32 %s73, 1
        %s154 = smul.addr %s153, 8
        %s155 = scalar_lea.vmem [#allocation7], %s154
        %s156 = smul.u32 8, %s28
        %s157 = smul.u32 8, %s28
        %v158 = vld [vmem:[%s137] sm:$0xff]
        %s159 = sld [smem:[#allocation3 + %s27]]
        %v160 = vstv %s159
        %v161 = vmul.f32 %v158, %v160
        %162 = vst [vmem:[%s155] sm:$0xff] %v161
        %s163 = sand.u32 %s73, 1
        %s164 = scalar_lea.sflag [#allocation6], %s163
        %s165 = sand.u32 %s73, 1
        %s166 = smul.addr %s165, 8
        %s167 = scalar_lea.vmem [#allocation7], %s166
        // Predicated region
        $region29: #{tpu_custom_call.1} parent=23 // pred_check
          %p168 = pneg %p83
        $region30: #{tpu_custom_call.1} parent=23 // pred_check_branch
          %170 = sbr.rel (%p168) target = $region32
        $region31: #{tpu_custom_call.1} parent=23 // pred_region
          %s171 = smul.u32 8, %s28
          %s173 = ssub.s32 128, 128
          %174 = vsyncadd %s164, %s173
          %s175 = smul.addr %s27, 8
          %s176 = sadd.s32 %s171, %s175
          %s177 = smul.addr %s176, 16
          %s178 = scalar_lea.hbm %s2, %s177
          %s180 = sshll.u32 %s167, 4
          %s181 = int_to_ptr.vmem [resolvable:$true] %s180
          %183 = dma.vmem_to_hbm [thread:$0]  %s181, 128, %s178, %s164
        $region32: #{tpu_custom_call.1} parent=23 // pred_fallthru
          _
      $region24: #{tpu_custom_call.1} parent=5 // pred_fallthru
        _
      %p184 = scmp.le.s32.totalorder 2, %s18
      // Predicated region
      $region33: #{tpu_custom_call.1} parent=5 // pred_check
        %p185 = pneg %p184
      $region34: #{tpu_custom_call.1} parent=5 // pred_check_branch
        %187 = sbr.rel (%p185) target = $region36
      $region35: #{tpu_custom_call.1} parent=5 // pred_region
        %s188 = ssub.s32 %s18, 2
        // Predicated region
        $region37: #{tpu_custom_call.1} parent=35 // pred_check
          %p189 = pneg %p89
        $region38: #{tpu_custom_call.1} parent=35 // pred_check_branch
          %191 = sbr.rel (%p189) target = $region40
        $region39: #{tpu_custom_call.1} parent=35 // pred_region
          %s192 = sand.u32 %s74, 1
          %s193 = scalar_lea.sflag [#allocation6], %s192
          %s194 = sand.u32 %s74, 1
          %s195 = smul.addr %s194, 8
          %s196 = scalar_lea.vmem [#allocation7], %s195
          %197 = dma.done %s193, 128
        $region40: #{tpu_custom_call.1} parent=35 // pred_fallthru
          _
      $region36: #{tpu_custom_call.1} parent=5 // pred_fallthru
        _
    $region6: #{tpu_custom_call.1} parent=1 // loop_footer
      %s22 = sadd.s32 1, %s18
    $region7: #{tpu_custom_call.1} parent=1 // loop_footer_branch
      %17 = sbr.rel target = $region3
    $region8: #{tpu_custom_call.1} parent=1 // loop_exit
      _
    %198 = vsyncpa [#allocation5], 1
    %s199 = scalar_lea.sflag [#allocation5], 1
    %200 = vsyncpa %s199, 1
    %201 = vsyncpa [#allocation6], 1
    %s202 = scalar_lea.sflag [#allocation6], 1
    %203 = vsyncpa %s202, 1

</llo_original>
